<compile_context>
chip_gen: v7x
topology: tpu7x:2x2x1
jax: 0.10.0
libtpu: 0.0.40
codegen_flags: <defaults>
</compile_context>

<pallas_src>
import jax
import jax.numpy as jnp
from jax.experimental import pallas as pl
from jax.experimental.pallas import tpu as pltpu


# ---------------------------------------------------------------------------
# Shared math
# ---------------------------------------------------------------------------

_EPS = 1e-12            # torch.nn.functional.normalize default eps
_EPS_SQ = _EPS * _EPS   # 1e-24 is representable in f32


def _rotate_math(sr, si, dr, di, rr, ri):
    """RotatE score for (TB, D) f32 tiles of the six row blocks -> (TB, 1) f32.

    x / max(||x||, eps) == x * rsqrt(max(sum(x^2), eps^2)).  The dst normalizers
    are folded into the final reductions instead of materializing dr_n / di_n.
    """
    eps_sq = jnp.float32(_EPS_SQ)

    def inv_norm(x):
        return jax.lax.rsqrt(
            jnp.maximum(jnp.sum(x * x, axis=-1, keepdims=True), eps_sq))

    sr = sr * inv_norm(sr)
    si = si * inv_norm(si)
    rr = rr * inv_norm(rr)
    ri = ri * inv_norm(ri)
    inv_dr = inv_norm(dr)
    inv_di = inv_norm(di)

    a = sr * rr - si * ri        # real part of src (*) rel rotation
    b = sr * ri + si * rr        # imag part of src (*) rel rotation

    re = (inv_dr * jnp.sum(a * dr, axis=-1, keepdims=True)
          + inv_di * jnp.sum(b * di, axis=-1, keepdims=True))
    im = (inv_di * jnp.sum(a * di, axis=-1, keepdims=True)
          + inv_dr * jnp.sum(b * dr, axis=-1, keepdims=True))
    return jnp.sqrt(re * re + im * im)


# ---------------------------------------------------------------------------
# Tile sizing
# ---------------------------------------------------------------------------

def _round_up(x, m):
    return ((x + m - 1) // m) * m


def _sublane(itemsize):
    # Native sublane tile: 8 rows for 4-byte dtypes, 16 for bf16, 32 for int8.
    return max(8, 32 // itemsize)


def _vmem_input_budget_bytes():
    """VMEM budget for the pipelined input streams (conservative when unknown)."""
    try:
        kind = jax.devices()[0].device_kind.lower()
    except Exception:
        kind = ""
    if "v5" in kind or "v6" in kind:
        return 48 * 1024 * 1024   # 128 MiB physical VMEM: bigger tiles amortize step overhead
    return 24 * 1024 * 1024       # v7x (64 MiB physical) / unknown: stay conservative


def _cap_for_grid_steps(tb, batch, sub):
    # Prefer >= 8 grid steps (megacore sharding on v7x + pipelining), never fewer
    # than 2 when the batch allows it, but keep tiles >= 512 rows so the ~0.35 us
    # per-step overhead stays amortized.
    tb = min(tb, max(512, pl.cdiv(batch, 8)))
    tb = min(tb, max(sub, pl.cdiv(batch, 2)))
    tb = max(sub, (tb // sub) * sub)
    if tb >= batch:
        tb = max(8, _round_up(batch, 8))   # one tile covering the whole batch
    return tb


def _choose_batch_tile(batch, hidden, itemsize):
    """Batch tile for the XLA-gather path (six double-buffered (TB, D) inputs)."""
    sub = _sublane(itemsize)
    tb = _vmem_input_budget_bytes() // (2 * 6 * max(hidden, 1) * itemsize)
    tb = min(tb, 8192)
    return _cap_for_grid_steps(tb, batch, sub)


def _choose_fused_tile(batch, hidden, itemsize):
    """Batch tile for the fused-gather path (single (6, TB, D) gather scratch)."""
    sub = _sublane(itemsize)
    tb = (12 * 1024 * 1024) // (6 * max(hidden, 1) * itemsize)
    tb = min(tb, 4096)
    return _cap_for_grid_steps(tb, batch, sub)


# ---------------------------------------------------------------------------
# Path 1: tiled scorer over pre-gathered rows (XLA gather outside the kernel)
# ---------------------------------------------------------------------------

def _rotate_tiles_kernel(sr_ref, si_ref, dr_ref, di_ref, rr_ref, ri_ref, o_ref):
    o_ref[...] = _rotate_math(
        sr_ref[...].astype(jnp.float32), si_ref[...].astype(jnp.float32),
        dr_ref[...].astype(jnp.float32), di_ref[...].astype(jnp.float32),
        rr_ref[...].astype(jnp.float32), ri_ref[...].astype(jnp.float32))


def rotate_score_tiled(sr, si, dr, di, rr, ri):
    """Score pre-gathered (B, D) rows (bf16 or f32).  Returns (B,) f32."""
    b, d = sr.shape
    itemsize = jnp.dtype(sr.dtype).itemsize
    tb = _choose_batch_tile(b, d, itemsize)
    n_tiles = pl.cdiv(b, tb)

    # No jnp.pad: the grid over-covers the batch; edge-block reads are unspecified
    # rows that cannot contaminate valid rows, and edge writes are masked.
    emb_spec = pl.BlockSpec((tb, d), lambda i: (i, 0))
    out_spec = pl.BlockSpec((tb, 1), lambda i: (i, 0))

    usage = 2 * (6 * tb * d * itemsize + tb * 4)   # double-buffered inputs + output
    vmem_limit = int(min(112 * 2**20, max(16 * 2**20, usage + usage // 2 + (4 << 20))))

    out = pl.pallas_call(
        _rotate_tiles_kernel,
        out_shape=jax.ShapeDtypeStruct((b, 1), jnp.float32),
        grid=(n_tiles,),
        in_specs=[emb_spec] * 6,
        out_specs=out_spec,
        compiler_params=pltpu.CompilerParams(
            dimension_semantics=("parallel",),
            vmem_limit_bytes=vmem_limit,
        ),
    )(sr, si, dr, di, rr, ri)
    return out[:, 0]


# ---------------------------------------------------------------------------
# Path 2: fused in-kernel DMA gather (scalar-prefetched indices, tables in HBM)
# ---------------------------------------------------------------------------

def _rotate_fused_kernel(src_idx_ref, rel_idx_ref, dst_idx_ref,            # SMEM (prefetch)
                         ent_real_hbm, ent_imag_hbm, rel_real_hbm, rel_imag_hbm,  # HBM (ANY)
                         o_ref,                                            # (TB, 1) f32 out
                         gather_buf, copy_sem):                            # scratch
    tb = o_ref.shape[0]
    row0 = pl.program_id(0) * tb

    def issue_row(r, carry):
        s_idx = src_idx_ref[row0 + r]
        d_idx = dst_idx_ref[row0 + r]
        e_idx = rel_idx_ref[row0 + r]
        sources = ((ent_real_hbm, s_idx), (ent_imag_hbm, s_idx),
                   (ent_real_hbm, d_idx), (ent_imag_hbm, d_idx),
                   (rel_real_hbm, e_idx), (rel_imag_hbm, e_idx))
        for slot, (table, idx) in enumerate(sources):
            pltpu.make_async_copy(
                table.at[pl.ds(idx, 1), :],
                gather_buf.at[slot, pl.ds(r, 1), :],
                copy_sem,
            ).start()
        return carry

    jax.lax.fori_loop(0, tb, issue_row, 0)

    def drain_row(r, carry):
        # Every row copy is a (1, D) transfer of the same dtype on the shared
        # semaphore, so one matching-shape wait retires one completion.
        for slot in range(6):
            pltpu.make_async_copy(
                ent_real_hbm.at[pl.ds(0, 1), :],
                gather_buf.at[slot, pl.ds(r, 1), :],
                copy_sem,
            ).wait()
        return carry

    jax.lax.fori_loop(0, tb, drain_row, 0)

    o_ref[...] = _rotate_math(
        gather_buf[0].astype(jnp.float32), gather_buf[1].astype(jnp.float32),
        gather_buf[2].astype(jnp.float32), gather_buf[3].astype(jnp.float32),
        gather_buf[4].astype(jnp.float32), gather_buf[5].astype(jnp.float32))


def rotate_score_fused(ent_real, ent_imag, rel_real, rel_imag, src, rel, dst):
    """Fused gather + score: per-row DMA gather from the HBM tables in-kernel."""
    _, d = ent_real.shape
    b = int(src.shape[0])
    itemsize = jnp.dtype(ent_real.dtype).itemsize
    tb = _choose_fused_tile(b, d, itemsize)
    n_tiles = pl.cdiv(b, tb)
    b_pad = n_tiles * tb

    def as_padded_i32(idx):
        idx = idx.astype(jnp.int32)
        if b_pad != b:
            # O(B) int32 padding is negligible; padded rows gather row 0 (keeps
            # every DMA in bounds) and are sliced off below.
            idx = jnp.pad(idx, (0, b_pad - b))
        return idx

    usage = 6 * tb * d * itemsize + 2 * tb * 4      # gather scratch + output
    vmem_limit = int(min(48 * 2**20, max(16 * 2**20, usage + usage // 2 + (4 << 20))))

    out = pl.pallas_call(
        _rotate_fused_kernel,
        out_shape=jax.ShapeDtypeStruct((b_pad, 1), jnp.float32),
        grid_spec=pltpu.PrefetchScalarGridSpec(
            num_scalar_prefetch=3,                              # src / rel / dst indices
            grid=(n_tiles,),
            in_specs=[pl.BlockSpec(memory_space=pl.ANY)] * 4,   # tables stay in HBM
            out_specs=pl.BlockSpec((tb, 1), lambda i, *_: (i, 0)),
            scratch_shapes=[
                pltpu.VMEM((6, tb, d), ent_real.dtype),         # sr, si, dr, di, rr, ri
                pltpu.SemaphoreType.DMA,
            ],
        ),
        compiler_params=pltpu.CompilerParams(
            dimension_semantics=("parallel",),
            vmem_limit_bytes=vmem_limit,
        ),
    )(as_padded_i32(src), as_padded_i32(rel), as_padded_i32(dst),
      ent_real, ent_imag, rel_real, rel_imag)
    return out[:b, 0]


# ---------------------------------------------------------------------------
# Module wrapper
# ---------------------------------------------------------------------------

class RotatEPallas:
    """JAX/Pallas port of the PyTorch RotatE module (forward pass only)."""

    # Per-row DMA gather only pays off once a table row is >= ~1 KiB.
    _FUSED_GATHER_MIN_ROW_BYTES = 1024

    def __init__(self, num_nodes, num_relations, hidden_channels, key,
                 table_dtype=jnp.bfloat16):
        self.num_nodes = num_nodes
        self.num_relations = num_relations
        self.hidden_channels = hidden_channels
        k1, k2, k3, k4 = jax.random.split(key, 4)

        # nn.Embedding default init ~ N(0, 1).  Tables stored in bf16 (HBM-bound
        # op); all math is done in f32 inside the kernel.
        def init(k, shape):
            return jax.random.normal(k, shape, dtype=jnp.float32).astype(table_dtype)

        self.entity_embedding_real = init(k1, (num_nodes, hidden_channels))
        self.entity_embedding_imag = init(k2, (num_nodes, hidden_channels))
        self.relation_embedding_real = init(k3, (num_relations, hidden_channels))
        self.relation_embedding_imag = init(k4, (num_relations, hidden_channels))
        # entity_embedding = real + imag (unused in forward, kept for parity)
        self.entity_embedding = (
            self.entity_embedding_real.astype(jnp.float32)
            + self.entity_embedding_imag.astype(jnp.float32)).astype(table_dtype)

    def __call__(self, src, rel, dst, gather="auto"):
        row_bytes = (self.hidden_channels
                     * jnp.dtype(self.entity_embedding_real.dtype).itemsize)
        use_fused = gather == "fused" or (
            gather == "auto" and row_bytes >= self._FUSED_GATHER_MIN_ROW_BYTES)
        if use_fused:
            return rotate_score_fused(
                self.entity_embedding_real, self.entity_embedding_imag,
                self.relation_embedding_real, self.relation_embedding_imag,
                src, rel, dst)
        # Small rows: per-row DMA descriptor overhead would dominate, so keep the
        # XLA gather and run the tiled scorer on the gathered bf16 rows.
        take = lambda t, i: jnp.take(t, i, axis=0)
        return rotate_score_tiled(
            take(self.entity_embedding_real, src),
            take(self.entity_embedding_imag, src),
            take(self.entity_embedding_real, dst),
            take(self.entity_embedding_imag, dst),
            take(self.relation_embedding_real, rel),
            take(self.relation_embedding_imag, rel))


def _reference_score(model, src, rel, dst):
    """Pure-JAX reference matching the PyTorch RotatE.forward semantics."""
    def norm(x):
        n = jnp.linalg.norm(x, axis=-1, keepdims=True)
        return x / jnp.maximum(n, _EPS)

    def take(t, i):
        return jnp.take(t, i, axis=0).astype(jnp.float32)

    sr = norm(take(model.entity_embedding_real, src))
    si = norm(take(model.entity_embedding_imag, src))
    dr = norm(take(model.entity_embedding_real, dst))
    di = norm(take(model.entity_embedding_imag, dst))
    rr = norm(take(model.relation_embedding_real, rel))
    ri = norm(take(model.relation_embedding_imag, rel))

    re = jnp.sum((sr * rr - si * ri) * dr + (sr * ri + si * rr) * di, axis=-1)
    im = jnp.sum((sr * rr - si * ri) * di + (si * rr + sr * ri) * dr, axis=-1)
    return jnp.sqrt(re ** 2 + im ** 2)


if __name__ == "__main__":
    key = jax.random.PRNGKey(0)
    k_model, k_data = jax.random.split(key, 2)

    num_nodes, num_relations, hidden_channels = 64, 8, 32
    model = RotatEPallas(num_nodes, num_relations, hidden_channels, k_model)

    # batch=8 exercises the exact-tile case; batch=100 exercises multi-tile grids,
    # partial edge blocks (no-pad path) and fused-path index padding.
    for batch in (8, 100):
        ks, kr, kd = jax.random.split(jax.random.fold_in(k_data, batch), 3)
        src = jax.random.randint(ks, (batch,), 0, num_nodes, dtype=jnp.int32)
        rel = jax.random.randint(kr, (batch,), 0, num_relations, dtype=jnp.int32)
        dst = jax.random.randint(kd, (batch,), 0, num_nodes, dtype=jnp.int32)

        ref = _reference_score(model, src, rel, dst)

        # Default path: 32 * 2 B = 64 B/row < 1 KiB -> XLA gather + tiled scorer.
        score = jax.block_until_ready(model(src, rel, dst))
        assert score.shape == (batch,)
        assert jnp.allclose(score, ref, atol=5e-5, rtol=5e-5)

        # Also exercise the fused in-kernel DMA-gather path.
        score_fused = jax.block_until_ready(model(src, rel, dst, gather="fused"))
        assert score_fused.shape == (batch,)
        assert jnp.allclose(score_fused, ref, atol=5e-5, rtol=5e-5)

    print("KERNEL_OK")
</pallas_src>

<mosaic_0001>
module attributes {stable_mosaic.version = 11 : i64} {
  func.func @_rotate_tiles_kernel(%arg0: i32, %arg1: memref<8x32xbf16, #tpu.memory_space<vmem>>, %arg2: memref<8x32xbf16, #tpu.memory_space<vmem>>, %arg3: memref<8x32xbf16, #tpu.memory_space<vmem>>, %arg4: memref<8x32xbf16, #tpu.memory_space<vmem>>, %arg5: memref<8x32xbf16, #tpu.memory_space<vmem>>, %arg6: memref<8x32xbf16, #tpu.memory_space<vmem>>, %arg7: memref<8x1xf32, #tpu.memory_space<vmem>>) attributes {dimension_semantics = [#tpu.dimension_semantics<parallel>], iteration_bounds = array<i64: 1>, scalar_prefetch = 0 : i64, scratch_operands = 0 : i64, tpu.core_type = #tpu.core_type<tc>, window_params = [{transform_indices = @transform_0, window_bounds = array<i64: 8, 32>}, {transform_indices = @transform_1, window_bounds = array<i64: 8, 32>}, {transform_indices = @transform_2, window_bounds = array<i64: 8, 32>}, {transform_indices = @transform_3, window_bounds = array<i64: 8, 32>}, {transform_indices = @transform_4, window_bounds = array<i64: 8, 32>}, {transform_indices = @transform_5, window_bounds = array<i64: 8, 32>}, {transform_indices = @transform_6, window_bounds = array<i64: 8, 1>}]} {
    %c0 = arith.constant 0 : index
    %c0_0 = arith.constant 0 : index
    %0 = vector.load %arg1[%c0, %c0_0] : memref<8x32xbf16, #tpu.memory_space<vmem>>, vector<8x32xbf16>
    %1 = arith.extf %0 : vector<8x32xbf16> to vector<8x32xf32>
    %c0_1 = arith.constant 0 : index
    %c0_2 = arith.constant 0 : index
    %2 = vector.load %arg2[%c0_1, %c0_2] : memref<8x32xbf16, #tpu.memory_space<vmem>>, vector<8x32xbf16>
    %3 = arith.extf %2 : vector<8x32xbf16> to vector<8x32xf32>
    %c0_3 = arith.constant 0 : index
    %c0_4 = arith.constant 0 : index
    %4 = vector.load %arg3[%c0_3, %c0_4] : memref<8x32xbf16, #tpu.memory_space<vmem>>, vector<8x32xbf16>
    %5 = arith.extf %4 : vector<8x32xbf16> to vector<8x32xf32>
    %c0_5 = arith.constant 0 : index
    %c0_6 = arith.constant 0 : index
    %6 = vector.load %arg4[%c0_5, %c0_6] : memref<8x32xbf16, #tpu.memory_space<vmem>>, vector<8x32xbf16>
    %7 = arith.extf %6 : vector<8x32xbf16> to vector<8x32xf32>
    %c0_7 = arith.constant 0 : index
    %c0_8 = arith.constant 0 : index
    %8 = vector.load %arg5[%c0_7, %c0_8] : memref<8x32xbf16, #tpu.memory_space<vmem>>, vector<8x32xbf16>
    %9 = arith.extf %8 : vector<8x32xbf16> to vector<8x32xf32>
    %c0_9 = arith.constant 0 : index
    %c0_10 = arith.constant 0 : index
    %10 = vector.load %arg6[%c0_9, %c0_10] : memref<8x32xbf16, #tpu.memory_space<vmem>>, vector<8x32xbf16>
    %11 = arith.extf %10 : vector<8x32xbf16> to vector<8x32xf32>
    %12 = arith.mulf %1, %1 : vector<8x32xf32>
    %cst = arith.constant dense<0.000000e+00> : vector<8xf32>
    %13 = vector.multi_reduction <add>, %12, %cst [1] : vector<8x32xf32> to vector<8xf32>
    %14 = vector.shape_cast %13 : vector<8xf32> to vector<8x1xf32>
    %cst_11 = arith.constant 1.000000e-24 : f32
    %15 = vector.broadcast %cst_11 : f32 to vector<8x1xf32>
    %16 = arith.maximumf %14, %15 : vector<8x1xf32>
    %17 = math.rsqrt %16 : vector<8x1xf32>
    %18 = vector.broadcast %17 : vector<8x1xf32> to vector<8x32xf32>
    %19 = arith.mulf %1, %18 : vector<8x32xf32>
    %20 = arith.mulf %3, %3 : vector<8x32xf32>
    %cst_12 = arith.constant dense<0.000000e+00> : vector<8xf32>
    %21 = vector.multi_reduction <add>, %20, %cst_12 [1] : vector<8x32xf32> to vector<8xf32>
    %22 = vector.shape_cast %21 : vector<8xf32> to vector<8x1xf32>
    %cst_13 = arith.constant 1.000000e-24 : f32
    %23 = vector.broadcast %cst_13 : f32 to vector<8x1xf32>
    %24 = arith.maximumf %22, %23 : vector<8x1xf32>
    %25 = math.rsqrt %24 : vector<8x1xf32>
    %26 = vector.broadcast %25 : vector<8x1xf32> to vector<8x32xf32>
    %27 = arith.mulf %3, %26 : vector<8x32xf32>
    %28 = arith.mulf %9, %9 : vector<8x32xf32>
    %cst_14 = arith.constant dense<0.000000e+00> : vector<8xf32>
    %29 = vector.multi_reduction <add>, %28, %cst_14 [1] : vector<8x32xf32> to vector<8xf32>
    %30 = vector.shape_cast %29 : vector<8xf32> to vector<8x1xf32>
    %cst_15 = arith.constant 1.000000e-24 : f32
    %31 = vector.broadcast %cst_15 : f32 to vector<8x1xf32>
    %32 = arith.maximumf %30, %31 : vector<8x1xf32>
    %33 = math.rsqrt %32 : vector<8x1xf32>
    %34 = vector.broadcast %33 : vector<8x1xf32> to vector<8x32xf32>
    %35 = arith.mulf %9, %34 : vector<8x32xf32>
    %36 = arith.mulf %11, %11 : vector<8x32xf32>
    %cst_16 = arith.constant dense<0.000000e+00> : vector<8xf32>
    %37 = vector.multi_reduction <add>, %36, %cst_16 [1] : vector<8x32xf32> to vector<8xf32>
    %38 = vector.shape_cast %37 : vector<8xf32> to vector<8x1xf32>
    %cst_17 = arith.constant 1.000000e-24 : f32
    %39 = vector.broadcast %cst_17 : f32 to vector<8x1xf32>
    %40 = arith.maximumf %38, %39 : vector<8x1xf32>
    %41 = math.rsqrt %40 : vector<8x1xf32>
    %42 = vector.broadcast %41 : vector<8x1xf32> to vector<8x32xf32>
    %43 = arith.mulf %11, %42 : vector<8x32xf32>
    %44 = arith.mulf %5, %5 : vector<8x32xf32>
    %cst_18 = arith.constant dense<0.000000e+00> : vector<8xf32>
    %45 = vector.multi_reduction <add>, %44, %cst_18 [1] : vector<8x32xf32> to vector<8xf32>
    %46 = vector.shape_cast %45 : vector<8xf32> to vector<8x1xf32>
    %cst_19 = arith.constant 1.000000e-24 : f32
    %47 = vector.broadcast %cst_19 : f32 to vector<8x1xf32>
    %48 = arith.maximumf %46, %47 : vector<8x1xf32>
    %49 = math.rsqrt %48 : vector<8x1xf32>
    %50 = arith.mulf %7, %7 : vector<8x32xf32>
    %cst_20 = arith.constant dense<0.000000e+00> : vector<8xf32>
    %51 = vector.multi_reduction <add>, %50, %cst_20 [1] : vector<8x32xf32> to vector<8xf32>
    %52 = vector.shape_cast %51 : vector<8xf32> to vector<8x1xf32>
    %cst_21 = arith.constant 1.000000e-24 : f32
    %53 = vector.broadcast %cst_21 : f32 to vector<8x1xf32>
    %54 = arith.maximumf %52, %53 : vector<8x1xf32>
    %55 = math.rsqrt %54 : vector<8x1xf32>
    %56 = arith.mulf %19, %35 : vector<8x32xf32>
    %57 = arith.mulf %27, %43 : vector<8x32xf32>
    %58 = arith.subf %56, %57 : vector<8x32xf32>
    %59 = arith.mulf %19, %43 : vector<8x32xf32>
    %60 = arith.mulf %27, %35 : vector<8x32xf32>
    %61 = arith.addf %59, %60 : vector<8x32xf32>
    %62 = arith.mulf %58, %5 : vector<8x32xf32>
    %cst_22 = arith.constant dense<0.000000e+00> : vector<8xf32>
    %63 = vector.multi_reduction <add>, %62, %cst_22 [1] : vector<8x32xf32> to vector<8xf32>
    %64 = vector.shape_cast %63 : vector<8xf32> to vector<8x1xf32>
    %65 = arith.mulf %49, %64 : vector<8x1xf32>
    %66 = arith.mulf %61, %7 : vector<8x32xf32>
    %cst_23 = arith.constant dense<0.000000e+00> : vector<8xf32>
    %67 = vector.multi_reduction <add>, %66, %cst_23 [1] : vector<8x32xf32> to vector<8xf32>
    %68 = vector.shape_cast %67 : vector<8xf32> to vector<8x1xf32>
    %69 = arith.mulf %55, %68 : vector<8x1xf32>
    %70 = arith.addf %65, %69 : vector<8x1xf32>
    %71 = arith.mulf %58, %7 : vector<8x32xf32>
    %cst_24 = arith.constant dense<0.000000e+00> : vector<8xf32>
    %72 = vector.multi_reduction <add>, %71, %cst_24 [1] : vector<8x32xf32> to vector<8xf32>
    %73 = vector.shape_cast %72 : vector<8xf32> to vector<8x1xf32>
    %74 = arith.mulf %55, %73 : vector<8x1xf32>
    %75 = arith.mulf %61, %5 : vector<8x32xf32>
    %cst_25 = arith.constant dense<0.000000e+00> : vector<8xf32>
    %76 = vector.multi_reduction <add>, %75, %cst_25 [1] : vector<8x32xf32> to vector<8xf32>
    %77 = vector.shape_cast %76 : vector<8xf32> to vector<8x1xf32>
    %78 = arith.mulf %49, %77 : vector<8x1xf32>
    %79 = arith.addf %74, %78 : vector<8x1xf32>
    %80 = arith.mulf %70, %70 : vector<8x1xf32>
    %81 = arith.mulf %79, %79 : vector<8x1xf32>
    %82 = arith.addf %80, %81 : vector<8x1xf32>
    %83 = math.sqrt %82 : vector<8x1xf32>
    %c0_26 = arith.constant 0 : index
    %c0_27 = arith.constant 0 : index
    %84 = vector.load %arg7[%c0_26, %c0_27] : memref<8x1xf32, #tpu.memory_space<vmem>>, vector<8x1xf32>
    tpu.vector_store %arg7[%c0_26, %c0_27], %83 {strides = array<i32>} : memref<8x1xf32, #tpu.memory_space<vmem>>, vector<8x1xf32>,
    return
  }
  func.func @transform_0(%arg0: i32) -> (i32, i32) {
    %c0_i32 = arith.constant 0 : i32
    %c0_i32_0 = arith.constant 0 : i32
    return %arg0, %c0_i32 : i32, i32
  }
  func.func @transform_1(%arg0: i32) -> (i32, i32) {
    %c0_i32 = arith.constant 0 : i32
    %c0_i32_0 = arith.constant 0 : i32
    return %arg0, %c0_i32 : i32, i32
  }
  func.func @transform_2(%arg0: i32) -> (i32, i32) {
    %c0_i32 = arith.constant 0 : i32
    %c0_i32_0 = arith.constant 0 : i32
    return %arg0, %c0_i32 : i32, i32
  }
  func.func @transform_3(%arg0: i32) -> (i32, i32) {
    %c0_i32 = arith.constant 0 : i32
    %c0_i32_0 = arith.constant 0 : i32
    return %arg0, %c0_i32 : i32, i32
  }
  func.func @transform_4(%arg0: i32) -> (i32, i32) {
    %c0_i32 = arith.constant 0 : i32
    %c0_i32_0 = arith.constant 0 : i32
    return %arg0, %c0_i32 : i32, i32
  }
  func.func @transform_5(%arg0: i32) -> (i32, i32) {
    %c0_i32 = arith.constant 0 : i32
    %c0_i32_0 = arith.constant 0 : i32
    return %arg0, %c0_i32 : i32, i32
  }
  func.func @transform_6(%arg0: i32) -> (i32, i32) {
    %c0_i32 = arith.constant 0 : i32
    %c0_i32_0 = arith.constant 0 : i32
    return %arg0, %c0_i32 : i32, i32
  }
}

</mosaic_0001>

<llo_original>
// kernel: tpu_custom_call.1
$region0: #{tpu_custom_call.1}
  #allocation0 [shape = 'u32[]', space=smem, size = 0x4, offset = 0x4, fixed_abs, tag = 'smem constant byte address 0x4 - core index']
  #allocation1 [shape = 'u32[144,128]{1,0:T(1,128)}', space=vmem, size = 0x12000, scoped, tag = 'internal scratch']
  %s0 = inlined_call_operand.hbm [shape: bf16[8,32], index: 0, kind: input, shape index: {}]
  %s1 = inlined_call_operand.hbm [shape: bf16[8,32], index: 1, kind: input, shape index: {}]
  %s2 = inlined_call_operand.vmem [shape: bf16[8,32], index: 2, kind: input, shape index: {}]
  %s3 = inlined_call_operand.vmem [shape: bf16[8,32], index: 3, kind: input, shape index: {}]
  %s4 = inlined_call_operand.vmem [shape: bf16[8,32], index: 4, kind: input, shape index: {}]
  %s5 = inlined_call_operand.vmem [shape: bf16[8,32], index: 5, kind: input, shape index: {}]
  %s6 = inlined_call_operand.vmem [shape: f32[8,1], index: 6, kind: output, shape index: {}]
  %s7 = sld [smem:[#allocation0]]
  $region42: #{tpu_custom_call.1} parent=0
    _
  %s9 = ssub.s32 1, %s7
  %s10 = scalar_select 0, %s9, %s7
  $region1: #{tpu_custom_call.1} parent=0
    #allocation2 [shape = 'u8[2048]{0}', space=vmem, size = 0x800, scoped, tag = 'input window, operand 0, single buffered']
    #allocation3 [shape = 's32[1]{0}', space=sflag, size = 0x4, scoped, tag = 'scoped memory for tpu_custom_call.1']
    #allocation4 [shape = 'u8[2048]{0}', space=vmem, size = 0x800, scoped, tag = 'input window, operand 1, single buffered']
    #allocation5 [shape = 's32[1]{0}', space=sflag, size = 0x4, scoped, tag = 'scoped memory for tpu_custom_call.1']
    %11 = vsyncpa [#allocation3], 0
    %12 = vsyncpa [#allocation5], 0
    // Predicated region
    $region2: #{tpu_custom_call.1} parent=1 // pred_check
      _
    $region3: #{tpu_custom_call.1} parent=1 // pred_check_branch
      %14 = sbr.rel (0) target = $region5
    $region4: #{tpu_custom_call.1} parent=1 // pred_region
      %s16 = ssub.s32 64, 64
      %17 = vsyncadd [#allocation3], %s16
      %s19 = sshll.u32 [#allocation2], 4
      %s20 = int_to_ptr.vmem [resolvable:$true] %s19
      %22 = dma.hbm_to_vmem [thread:$0]  %s0, 64, %s20, [#allocation3]
    $region5: #{tpu_custom_call.1} parent=1 // pred_fallthru
      _
    // Predicated region
    $region6: #{tpu_custom_call.1} parent=1 // pred_check
      _
    $region7: #{tpu_custom_call.1} parent=1 // pred_check_branch
      %24 = sbr.rel (0) target = $region9
    $region8: #{tpu_custom_call.1} parent=1 // pred_region
      %s26 = ssub.s32 64, 64
      %27 = vsyncadd [#allocation5], %s26
      %s29 = sshll.u32 [#allocation4], 4
      %s30 = int_to_ptr.vmem [resolvable:$true] %s29
      %32 = dma.hbm_to_vmem [thread:$0]  %s1, 64, %s30, [#allocation5]
    $region9: #{tpu_custom_call.1} parent=1 // pred_fallthru
      _
    // Predicated region
    $region10: #{tpu_custom_call.1} parent=1 // pred_check
      _
    $region11: #{tpu_custom_call.1} parent=1 // pred_check_branch
      %34 = sbr.rel (0) target = $region13
    $region12: #{tpu_custom_call.1} parent=1 // pred_region
      _
    $region13: #{tpu_custom_call.1} parent=1 // pred_fallthru
      _
    // Predicated region
    $region14: #{tpu_custom_call.1} parent=1 // pred_check
      _
    $region15: #{tpu_custom_call.1} parent=1 // pred_check_branch
      %36 = sbr.rel (0) target = $region17
    $region16: #{tpu_custom_call.1} parent=1 // pred_region
      _
    $region17: #{tpu_custom_call.1} parent=1 // pred_fallthru
      _
    // Predicated region
    $region18: #{tpu_custom_call.1} parent=1 // pred_check
      _
    $region19: #{tpu_custom_call.1} parent=1 // pred_check_branch
      %38 = sbr.rel (0) target = $region21
    $region20: #{tpu_custom_call.1} parent=1 // pred_region
      _
    $region21: #{tpu_custom_call.1} parent=1 // pred_fallthru
      _
    // Predicated region
    $region22: #{tpu_custom_call.1} parent=1 // pred_check
      _
    $region23: #{tpu_custom_call.1} parent=1 // pred_check_branch
      %40 = sbr.rel (0) target = $region25
    $region24: #{tpu_custom_call.1} parent=1 // pred_region
      _
    $region25: #{tpu_custom_call.1} parent=1 // pred_fallthru
      _
    // Predicated region
    $region26: #{tpu_custom_call.1} parent=1 // pred_check
      _
    $region27: #{tpu_custom_call.1} parent=1 // pred_check_branch
      %42 = sbr.rel (0) target = $region29
    $region28: #{tpu_custom_call.1} parent=1 // pred_region
      %43 = dma.done [#allocation3], 64
    $region29: #{tpu_custom_call.1} parent=1 // pred_fallthru
      _
    // Predicated region
    $region30: #{tpu_custom_call.1} parent=1 // pred_check
      _
    $region31: #{tpu_custom_call.1} parent=1 // pred_check_branch
      %45 = sbr.rel (0) target = $region33
    $region32: #{tpu_custom_call.1} parent=1 // pred_region
      %46 = dma.done [#allocation5], 64
    $region33: #{tpu_custom_call.1} parent=1 // pred_fallthru
      _
    %v47 = vld [vmem:[#allocation2] sm:$0xf]
    %v48 = vunpack.c.l.bf16 %v47
    %v49 = vld [vmem:[#allocation4] sm:$0xf]
    %v50 = vunpack.c.l.bf16 %v49
    %v51 = vld [vmem:[%s2] sm:$0xf]
    %v52 = vunpack.c.l.bf16 %v51
    %v53 = vld [vmem:[%s3] sm:$0xf]
    %v54 = vunpack.c.l.bf16 %v53
    %v55 = vld [vmem:[%s4] sm:$0xf]
    %v56 = vunpack.c.l.bf16 %v55
    %v57 = vld [vmem:[%s5] sm:$0xf]
    %v58 = vunpack.c.l.bf16 %v57
    %v59 = vmul.f32 %v48, %v48
    %vm60 = vcmask 261120
    %v61 = vsel %vm60, %v59, 0.0
    %62 = vadd.xlane.f32.xlu0 %v61
    %v63 = vpop.xlane.xlu0 %62
    %v64 = vmax.f32 %v63, 1e-24
    %v65 = vrsqrt.pop %v64
    %v66 = vmul.f32 %v48, %v65
    %v67 = vmul.f32 %v50, %v50
    %v68 = vsel %vm60, %v67, 0.0
    %69 = vadd.xlane.f32.xlu0 %v68
    %v70 = vpop.xlane.xlu0 %69
    %v71 = vmax.f32 %v70, 1e-24
    %v72 = vrsqrt.pop %v71
    %v73 = vmul.f32 %v50, %v72
    %v74 = vmul.f32 %v56, %v56
    %v75 = vsel %vm60, %v74, 0.0
    %76 = vadd.xlane.f32.xlu0 %v75
    %v77 = vpop.xlane.xlu0 %76
    %v78 = vmax.f32 %v77, 1e-24
    %v79 = vrsqrt.pop %v78
    %v80 = vmul.f32 %v56, %v79
    %v81 = vmul.f32 %v58, %v58
    %v82 = vsel %vm60, %v81, 0.0
    %83 = vadd.xlane.f32.xlu0 %v82
    %v84 = vpop.xlane.xlu0 %83
    %v85 = vmax.f32 %v84, 1e-24
    %v86 = vrsqrt.pop %v85
    %v87 = vmul.f32 %v58, %v86
    %v88 = vmul.f32 %v52, %v52
    %v89 = vsel %vm60, %v88, 0.0
    %90 = vadd.xlane.f32.xlu0 %v89
    %v91 = vpop.xlane.xlu0 %90
    %v92 = vmax.f32 %v91, 1e-24
    %v93 = vrsqrt.pop %v92
    %v94 = vmul.f32 %v54, %v54
    %v95 = vsel %vm60, %v94, 0.0
    %96 = vadd.xlane.f32.xlu0 %v95
    %v97 = vpop.xlane.xlu0 %96
    %v98 = vmax.f32 %v97, 1e-24
    %v99 = vrsqrt.pop %v98
    %v100 = vmul.f32 %v66, %v80
    %v101 = vmul.f32 %v73, %v87
    %v102 = vsub.f32 %v100, %v101
    %v103 = vmul.f32 %v66, %v87
    %v104 = vmul.f32 %v73, %v80
    %v105 = vadd.f32 %v103, %v104
    %v106 = vmul.f32 %v102, %v52
    %v107 = vsel %vm60, %v106, 0.0
    %108 = vadd.xlane.f32.xlu0 %v107
    %v109 = vpop.xlane.xlu0 %108
    %v110 = vmul.f32 %v93, %v109
    %v111 = vmul.f32 %v105, %v54
    %v112 = vsel %vm60, %v111, 0.0
    %113 = vadd.xlane.f32.xlu0 %v112
    %v114 = vpop.xlane.xlu0 %113
    %v115 = vmul.f32 %v99, %v114
    %v116 = vadd.f32 %v110, %v115
    %v117 = vmul.f32 %v102, %v54
    %v118 = vsel %vm60, %v117, 0.0
    %119 = vadd.xlane.f32.xlu0 %v118
    %v120 = vpop.xlane.xlu0 %119
    %v121 = vmul.f32 %v99, %v120
    %v122 = vmul.f32 %v105, %v52
    %v123 = vsel %vm60, %v122, 0.0
    %124 = vadd.xlane.f32.xlu0 %v123
    %v125 = vpop.xlane.xlu0 %124
    %v126 = vmul.f32 %v93, %v125
    %v127 = vadd.f32 %v121, %v126
    %v128 = vmul.f32 %v116, %v116
    %v129 = vmul.f32 %v127, %v127
    %v130 = vadd.f32 %v128, %v129
    %v131 = vrsqrt.pop %v130
    %v132 = vmul.f32 %v130, %v131
    %vm133 = vcmp.eq.f32.partialorder %v130, inf
    %v134 = vsel %vm133, %v130, %v132
    %vm135 = vcmp.eq.f32.partialorder %v130, 0.0
    %v136 = vand.u32 %v130, 2147483648
    %v137 = vsel %vm135, %v136, %v134
    %vm138 = vcmask 7168
    %139 = vst.msk [vmem:[%s6] sm:$0xff] %vm138, %v137
    // Predicated region
    $region34: #{tpu_custom_call.1} parent=1 // pred_check
      _
    $region35: #{tpu_custom_call.1} parent=1 // pred_check_branch
      %141 = sbr.rel (0) target = $region37
    $region36: #{tpu_custom_call.1} parent=1 // pred_region
      _
    $region37: #{tpu_custom_call.1} parent=1 // pred_fallthru
      _
    // Predicated region
    $region38: #{tpu_custom_call.1} parent=1 // pred_check
      _
    $region39: #{tpu_custom_call.1} parent=1 // pred_check_branch
      %143 = sbr.rel (0) target = $region41
    $region40: #{tpu_custom_call.1} parent=1 // pred_region
      _
    $region41: #{tpu_custom_call.1} parent=1 // pred_fallthru
      _
    %144 = vsyncpa [#allocation3], 1
    %145 = vsyncpa [#allocation5], 1

</llo_original>
